<compile_context>
chip_gen: v6e
topology: v6e:2x2x1
jax: 0.10.0
libtpu: 0.0.40
codegen_flags: <defaults>
</compile_context>

<pallas_src>
import functools

import jax
import jax.numpy as jnp
from jax.experimental import pallas as pl
from jax.experimental.pallas import tpu as pltpu


# ---------------------------------------------------------------------------
# Tiling helper
# ---------------------------------------------------------------------------

def _pick_tile(dim, preferred, align):
    """Largest tile <= preferred that divides dim and is `align`-aligned; else full dim."""
    if dim <= preferred:
        return dim
    t = (preferred // align) * align
    while t >= align:
        if dim % t == 0:
            return t
        t -= align
    return dim  # fall back to full (monolithic) dim


# ---------------------------------------------------------------------------
# Pallas kernels
# ---------------------------------------------------------------------------

def _layernorm_kernel(x_ref, gamma_ref, beta_ref, o_ref):
    # x_ref: (TM, D), gamma/beta: (1, D)
    x = x_ref[...]
    mean = jnp.mean(x, axis=-1, keepdims=True)
    xc = x - mean
    var = jnp.mean(xc * xc, axis=-1, keepdims=True)
    o_ref[...] = xc * jax.lax.rsqrt(var + 1e-5) * gamma_ref[...] + beta_ref[...]


def _linear_nobias_kernel(x_ref, w_ref, o_ref, acc_ref):
    # x_ref: (TM, TK), w_ref: (TK, TN), o_ref/acc_ref: (TM, TN); K is grid axis 2.
    @pl.when(pl.program_id(2) == 0)
    def _():
        acc_ref[...] = jnp.zeros_like(acc_ref)

    acc_ref[...] += jnp.dot(x_ref[...], w_ref[...],
                            preferred_element_type=jnp.float32)

    @pl.when(pl.program_id(2) == pl.num_programs(2) - 1)
    def _():
        o_ref[...] = acc_ref[...]


def _linear_bias_kernel(x_ref, w_ref, b_ref, o_ref, acc_ref):
    @pl.when(pl.program_id(2) == 0)
    def _():
        acc_ref[...] = jnp.zeros_like(acc_ref)

    acc_ref[...] += jnp.dot(x_ref[...], w_ref[...],
                            preferred_element_type=jnp.float32)

    @pl.when(pl.program_id(2) == pl.num_programs(2) - 1)
    def _():
        o_ref[...] = acc_ref[...] + b_ref[...]


def _attention_fused_kernel(qkv_ref, w_out_ref, b_out_ref, attn_ref, out_ref,
                            *, heads, dim_head, scale):
    # qkv_ref : (1, N, 3*inner)   per-batch qkv projection (q | k | v feature blocks)
    # w_out_ref: (inner, D)       output projection weight (already transposed: x @ w)
    # b_out_ref: (1, D)
    # attn_ref : (1, H, N, N)     softmax attention (returned, per PyTorch semantics)
    # out_ref  : (1, N, D)        final projected output
    inner = heads * dim_head
    N = qkv_ref.shape[1]
    D = out_ref.shape[2]

    acc = jnp.zeros((N, D), jnp.float32)
    for h in range(heads):  # static unroll over heads (compile-time constant)
        lo = h * dim_head
        hi = lo + dim_head
        # Fold the softmax scale into q (O(N*Dh) instead of O(N^2) scaling of dots).
        q = qkv_ref[0, :, lo:hi] * scale
        k = qkv_ref[0, :, inner + lo:inner + hi]
        v = qkv_ref[0, :, 2 * inner + lo:2 * inner + hi]

        # q @ k^T without materializing a transpose: contract the last axes.
        dots = jax.lax.dot_general(q, k, (((1,), (1,)), ((), ())),
                                   preferred_element_type=jnp.float32)
        dots = dots - jnp.max(dots, axis=-1, keepdims=True)
        e = jnp.exp(dots)
        attn = e * pl.reciprocal(jnp.sum(e, axis=-1, keepdims=True), approx=True)
        attn_ref[0, h] = attn

        head_out = jnp.dot(attn, v, preferred_element_type=jnp.float32)  # (N, Dh)
        # Fused output projection: concat-then-matmul == sum over heads of per-head GEMMs.
        acc = acc + jnp.dot(head_out, w_out_ref[lo:hi, :],
                            preferred_element_type=jnp.float32)

    out_ref[0] = acc + b_out_ref[...]


# ---------------------------------------------------------------------------
# Pallas wrappers
# ---------------------------------------------------------------------------

def pallas_layernorm(x2d, gamma, beta, *, tm=256):
    M, D = x2d.shape
    tm = _pick_tile(M, tm, 8)
    return pl.pallas_call(
        _layernorm_kernel,
        out_shape=jax.ShapeDtypeStruct((M, D), jnp.float32),
        grid=(M // tm,),
        in_specs=[
            pl.BlockSpec((tm, D), lambda i: (i, 0)),
            pl.BlockSpec((1, D), lambda i: (0, 0)),
            pl.BlockSpec((1, D), lambda i: (0, 0)),
        ],
        out_specs=pl.BlockSpec((tm, D), lambda i: (i, 0)),
        compiler_params=pltpu.CompilerParams(dimension_semantics=("parallel",)),
    )(x2d, gamma.reshape(1, D), beta.reshape(1, D))


def pallas_linear(x2d, w, b=None, *, tm=256, tn=256, tk=512):
    """Tiled y = x @ w (+ b). x2d: (M, K), w: (K, N), b: (N,) or None."""
    # NOTE: tile defaults are sized conservatively so 2x double-buffered inputs + f32
    # accumulator fit comfortably inside the default scoped VMEM on v5e/v6e/v7x.
    M, K = x2d.shape
    K2, N = w.shape
    assert K == K2
    tm = _pick_tile(M, tm, 8)
    tn = _pick_tile(N, tn, 128)
    tk = _pick_tile(K, tk, 128)
    grid = (M // tm, N // tn, K // tk)

    in_specs = [
        pl.BlockSpec((tm, tk), lambda i, j, k: (i, k)),
        pl.BlockSpec((tk, tn), lambda i, j, k: (k, j)),
    ]
    args = [x2d, w]
    if b is None:
        kernel = _linear_nobias_kernel
    else:
        kernel = _linear_bias_kernel
        in_specs.append(pl.BlockSpec((1, tn), lambda i, j, k: (0, j)))
        args.append(b.reshape(1, N))

    return pl.pallas_call(
        kernel,
        out_shape=jax.ShapeDtypeStruct((M, N), jnp.float32),
        grid=grid,
        in_specs=in_specs,
        out_specs=pl.BlockSpec((tm, tn), lambda i, j, k: (i, j)),
        scratch_shapes=[pltpu.VMEM((tm, tn), jnp.float32)],
        compiler_params=pltpu.CompilerParams(
            dimension_semantics=("parallel", "parallel", "arbitrary")),
    )(*args)


def pallas_attention_fused(qkv, w_out, b_out, *, heads, dim_head, scale):
    """qkv: (B, N, 3*inner) -> (attn: (B, H, N, N), out: (B, N, D))."""
    B, N, three_inner = qkv.shape
    inner = heads * dim_head
    assert three_inner == 3 * inner
    D = w_out.shape[1]
    kernel = functools.partial(_attention_fused_kernel, heads=heads,
                               dim_head=dim_head, scale=scale)
    return pl.pallas_call(
        kernel,
        out_shape=(
            jax.ShapeDtypeStruct((B, heads, N, N), jnp.float32),
            jax.ShapeDtypeStruct((B, N, D), jnp.float32),
        ),
        grid=(B,),
        in_specs=[
            pl.BlockSpec((1, N, 3 * inner), lambda b: (b, 0, 0)),
            pl.BlockSpec((inner, D), lambda b: (0, 0)),
            pl.BlockSpec((1, D), lambda b: (0, 0)),
        ],
        out_specs=(
            pl.BlockSpec((1, heads, N, N), lambda b: (b, 0, 0, 0)),
            pl.BlockSpec((1, N, D), lambda b: (b, 0, 0)),
        ),
        compiler_params=pltpu.CompilerParams(dimension_semantics=("parallel",)),
    )(qkv, w_out, b_out.reshape(1, D))


# ---------------------------------------------------------------------------
# Modules (parameter containers + forward glue)
# ---------------------------------------------------------------------------

class PallasAttention:
    """Mirror of the PyTorch Attention module (dropout=0)."""

    def __init__(self, dim, heads=8, dim_head=64, *, key):
        self.dim = dim
        self.heads = heads
        self.dim_head = dim_head
        self.inner_dim = heads * dim_head
        self.scale = dim ** (-0.5)  # model dim, not head dim (matches PyTorch source)
        k1, k2, k3 = jax.random.split(key, 3)
        # to_qkv: Linear(dim, inner_dim*3, bias=False); stored transposed (K, N) so x @ w.
        self.w_qkv = 0.02 * jax.random.normal(k1, (dim, 3 * self.inner_dim), jnp.float32)
        # to_out[0]: Linear(inner_dim, dim) with bias; stored transposed (inner, dim).
        self.w_out = 0.02 * jax.random.normal(k2, (self.inner_dim, dim), jnp.float32)
        self.b_out = 0.02 * jax.random.normal(k3, (dim,), jnp.float32)

    def __call__(self, x, mask=None):
        # TODO(synk): mask path (F.pad / masked_fill) not implemented; mask=None only.
        assert mask is None
        B, N, D = x.shape

        # QKV projection: bias-free tiled matmul (no fake zero-bias traffic).
        qkv = pallas_linear(x.reshape(B * N, D), self.w_qkv)
        qkv = qkv.reshape(B, N, 3 * self.inner_dim)  # free reshape, no transpose

        # Fused attention core + head merge + output projection (+ bias).
        attn, out = pallas_attention_fused(
            qkv, self.w_out, self.b_out,
            heads=self.heads, dim_head=self.dim_head, scale=self.scale)
        return attn, out  # Dropout(0.0) == identity


class PallasPreNorm:
    """Mirror of the PyTorch PreNorm module."""

    def __init__(self, dim, fn):
        self.dim = dim
        # nn.LayerNorm(dim) default init: weight=1, bias=0, eps=1e-5.
        self.gamma = jnp.ones((dim,), jnp.float32)
        self.beta = jnp.zeros((dim,), jnp.float32)
        self.fn = fn

    def _norm(self, x):
        B, N, D = x.shape
        return pallas_layernorm(x.reshape(B * N, D), self.gamma, self.beta).reshape(
            B, N, D)

    def __call__(self, x, **kwargs):
        if isinstance(self.fn, PallasAttention):
            attn, out = self.fn(x, **kwargs)
            return (attn, out)  # exact semantics: norm is NOT applied on this branch
        else:
            return (None, self.fn(self._norm(x), **kwargs))


# ---------------------------------------------------------------------------
# Main
# ---------------------------------------------------------------------------

if __name__ == "__main__":
    key = jax.random.PRNGKey(0)
    k_x, k_attn = jax.random.split(key)

    B, N, DIM, HEADS, DIM_HEAD = 2, 8, 32, 4, 16
    x = jax.random.normal(k_x, (B, N, DIM), jnp.float32)

    # Branch 1: fn is Attention -> returns (attn, out), norm unused (exact semantics).
    attn_fn = PallasAttention(DIM, heads=HEADS, dim_head=DIM_HEAD, key=k_attn)
    prenorm_attn = PallasPreNorm(DIM, attn_fn)
    attn, out = prenorm_attn(x)
    jax.block_until_ready((attn, out))
    assert attn.shape == (B, HEADS, N, N)
    assert out.shape == (B, N, DIM)
    assert bool(jnp.all(jnp.isfinite(attn))) and bool(jnp.all(jnp.isfinite(out)))

    # Branch 2: fn is not Attention -> returns (None, fn(LayerNorm(x))).
    prenorm_other = PallasPreNorm(DIM, lambda y: y)
    none_attn, out2 = prenorm_other(x)
    jax.block_until_ready(out2)
    assert none_attn is None
    assert out2.shape == (B, N, DIM)

    print("KERNEL_OK")
</pallas_src>

<mosaic_0001>
module attributes {stable_mosaic.version = 11 : i64} {
  func.func @_linear_nobias_kernel(%arg0: i32, %arg1: i32, %arg2: i32, %arg3: memref<16x32xf32, #tpu.memory_space<vmem>>, %arg4: memref<32x192xf32, #tpu.memory_space<vmem>>, %arg5: memref<16x192xf32, #tpu.memory_space<vmem>>, %arg6: memref<16x192xf32, #tpu.memory_space<vmem>>) attributes {dimension_semantics = [#tpu.dimension_semantics<parallel>, #tpu.dimension_semantics<parallel>, #tpu.dimension_semantics<arbitrary>], iteration_bounds = array<i64: 1, 1, 1>, scalar_prefetch = 0 : i64, scratch_operands = 1 : i64, tpu.core_type = #tpu.core_type<tc>, window_params = [{transform_indices = @transform_0, window_bounds = array<i64: 16, 32>}, {transform_indices = @transform_1, window_bounds = array<i64: 32, 192>}, {transform_indices = @transform_2, window_bounds = array<i64: 16, 192>}]} {
    %c0_i32 = arith.constant 0 : i32
    %0 = arith.cmpi eq, %arg2, %c0_i32 : i32
    %1 = arith.extui %0 : i1 to i32
    %c0_i32_0 = arith.constant 0 : i32
    %2 = arith.cmpi ne, %1, %c0_i32_0 : i32
    scf.if %2 {
      %cst_10 = arith.constant 0.000000e+00 : f32
      %12 = vector.broadcast %cst_10 : f32 to vector<16x192xf32>
      %c0_11 = arith.constant 0 : index
      %c0_12 = arith.constant 0 : index
      %13 = vector.load %arg6[%c0_11, %c0_12] : memref<16x192xf32, #tpu.memory_space<vmem>>, vector<16x192xf32>
      tpu.vector_store %arg6[%c0_11, %c0_12], %12 {strides = array<i32>} : memref<16x192xf32, #tpu.memory_space<vmem>>, vector<16x192xf32>,
    } else {
    }
    %c0 = arith.constant 0 : index
    %c0_1 = arith.constant 0 : index
    %3 = vector.load %arg6[%c0, %c0_1] : memref<16x192xf32, #tpu.memory_space<vmem>>, vector<16x192xf32>
    %c0_2 = arith.constant 0 : index
    %c0_3 = arith.constant 0 : index
    %4 = vector.load %arg3[%c0_2, %c0_3] : memref<16x32xf32, #tpu.memory_space<vmem>>, vector<16x32xf32>
    %c0_4 = arith.constant 0 : index
    %c0_5 = arith.constant 0 : index
    %5 = vector.load %arg4[%c0_4, %c0_5] : memref<32x192xf32, #tpu.memory_space<vmem>>, vector<32x192xf32>
    %cst = arith.constant dense<0.000000e+00> : vector<16x192xf32>
    %6 = tpu.matmul %4, %5, %cst {dimension_numbers = #tpu.dot_dimension_numbers<[1], [0], [0], [1], [0, 0, 1, 1], [], []>} : vector<16x32xf32>, vector<32x192xf32>, vector<16x192xf32> -> vector<16x192xf32>
    %7 = arith.addf %3, %6 : vector<16x192xf32>
    %c0_6 = arith.constant 0 : index
    %c0_7 = arith.constant 0 : index
    %8 = vector.load %arg6[%c0_6, %c0_7] : memref<16x192xf32, #tpu.memory_space<vmem>>, vector<16x192xf32>
    tpu.vector_store %arg6[%c0_6, %c0_7], %7 {strides = array<i32>} : memref<16x192xf32, #tpu.memory_space<vmem>>, vector<16x192xf32>,
    %c0_i32_8 = arith.constant 0 : i32
    %9 = arith.cmpi eq, %arg2, %c0_i32_8 : i32
    %10 = arith.extui %9 : i1 to i32
    %c0_i32_9 = arith.constant 0 : i32
    %11 = arith.cmpi ne, %10, %c0_i32_9 : i32
    scf.if %11 {
      %c0_10 = arith.constant 0 : index
      %c0_11 = arith.constant 0 : index
      %12 = vector.load %arg6[%c0_10, %c0_11] : memref<16x192xf32, #tpu.memory_space<vmem>>, vector<16x192xf32>
      %c0_12 = arith.constant 0 : index
      %c0_13 = arith.constant 0 : index
      %13 = vector.load %arg5[%c0_12, %c0_13] : memref<16x192xf32, #tpu.memory_space<vmem>>, vector<16x192xf32>
      tpu.vector_store %arg5[%c0_12, %c0_13], %12 {strides = array<i32>} : memref<16x192xf32, #tpu.memory_space<vmem>>, vector<16x192xf32>,
    } else {
    }
    return
  }
  func.func @transform_0(%arg0: i32, %arg1: i32, %arg2: i32) -> (i32, i32) {
    %c0_i32 = arith.constant 0 : i32
    return %arg0, %arg2 : i32, i32
  }
  func.func @transform_1(%arg0: i32, %arg1: i32, %arg2: i32) -> (i32, i32) {
    %c0_i32 = arith.constant 0 : i32
    return %arg2, %arg1 : i32, i32
  }
  func.func @transform_2(%arg0: i32, %arg1: i32, %arg2: i32) -> (i32, i32) {
    %c0_i32 = arith.constant 0 : i32
    return %arg0, %arg1 : i32, i32
  }
}

</mosaic_0001>

<llo_original>
// kernel: tpu_custom_call.1
$region0: #{tpu_custom_call.1}
  #allocation0 [shape = 'u32[]', space=smem, size = 0x4, offset = 0x4, fixed_abs, tag = 'smem constant byte address 0x4 - core index']
  #allocation1 [shape = 'u32[144,128]{1,0:T(1,128)}', space=vmem, size = 0x12000, scoped, tag = 'internal scratch']
  #allocation2 [shape = 'f32[16,192]{1,0:T(8,128)}', space=vmem, size = 0x4000, scoped, tag = 'scratch operand']
  %s0 = inlined_call_operand.hbm [shape: f32[16,32], index: 0, kind: input, shape index: {}]
  %s1 = inlined_call_operand.hbm [shape: f32[32,192], index: 1, kind: input, shape index: {}]
  %s2 = inlined_call_operand.hbm [shape: f32[16,192], index: 2, kind: output, shape index: {}]
  %s3 = sld [smem:[#allocation0]]
  $region34: #{tpu_custom_call.1} parent=0
    _
  %s5 = ssub.s32 1, %s3
  %s6 = scalar_select 0, %s5, %s3
  $region1: #{tpu_custom_call.1} parent=0
    #allocation3 [shape = 'u8[8192]{0}', space=vmem, size = 0x2000, scoped, tag = 'input window, operand 0, single buffered']
    #allocation4 [shape = 's32[1]{0}', space=sflag, size = 0x4, scoped, tag = 'scoped memory for tpu_custom_call.1']
    #allocation5 [shape = 's32[1]{0}', space=sflag, size = 0x4, scoped, tag = 'scoped memory for tpu_custom_call.1']
    #allocation6 [shape = 'u8[32768]{0}', space=vmem, size = 0x8000, scoped, tag = 'input window, operand 1, single buffered']
    #allocation7 [shape = 's32[1]{0}', space=sflag, size = 0x4, scoped, tag = 'scoped memory for tpu_custom_call.1']
    #allocation8 [shape = 'u8[16384]{0}', space=vmem, size = 0x4000, scoped, tag = 'output window, operand 0, single buffered']
    %7 = vsyncpa [#allocation4], 0
    %8 = vsyncpa [#allocation7], 0
    %9 = vsyncpa [#allocation5], 0
    // Predicated region
    $region2: #{tpu_custom_call.1} parent=1 // pred_check
      _
    $region3: #{tpu_custom_call.1} parent=1 // pred_check_branch
      %11 = sbr.rel (0) target = $region5
    $region4: #{tpu_custom_call.1} parent=1 // pred_region
      %s13 = ssub.s32 256, 256
      %14 = vsyncadd [#allocation4], %s13
      %s15 = sshll.u32 [#allocation3], 4
      %s16 = int_to_ptr.vmem [resolvable:$true] %s15
      %21 = dma.hbm_to_vmem [thread:$0]  %s0, 256, %s16, [#allocation4], 128, 128, 8
    $region5: #{tpu_custom_call.1} parent=1 // pred_fallthru
      _
    // Predicated region
    $region6: #{tpu_custom_call.1} parent=1 // pred_check
      _
    $region7: #{tpu_custom_call.1} parent=1 // pred_check_branch
      %23 = sbr.rel (0) target = $region9
    $region8: #{tpu_custom_call.1} parent=1 // pred_region
      %s25 = ssub.s32 1024, 1024
      %26 = vsyncadd [#allocation7], %s25
      %s27 = sshll.u32 [#allocation6], 4
      %s28 = int_to_ptr.vmem [resolvable:$true] %s27
      %33 = dma.hbm_to_vmem [thread:$0]  %s1, 1024, %s28, [#allocation7], 256, 256, 16
    $region9: #{tpu_custom_call.1} parent=1 // pred_fallthru
      _
    // Predicated region
    $region10: #{tpu_custom_call.1} parent=1 // pred_check
      _
    $region11: #{tpu_custom_call.1} parent=1 // pred_check_branch
      %35 = sbr.rel (0) target = $region13
    $region12: #{tpu_custom_call.1} parent=1 // pred_region
      %36 = dma.done [#allocation4], 256
    $region13: #{tpu_custom_call.1} parent=1 // pred_fallthru
      _
    // Predicated region
    $region14: #{tpu_custom_call.1} parent=1 // pred_check
      _
    $region15: #{tpu_custom_call.1} parent=1 // pred_check_branch
      %38 = sbr.rel (0) target = $region17
    $region16: #{tpu_custom_call.1} parent=1 // pred_region
      %39 = dma.done [#allocation7], 1024
    $region17: #{tpu_custom_call.1} parent=1 // pred_fallthru
      _
    %p40 = scmp.eq.s32.totalorder 0, 0
    // Predicated region
    $region18: #{tpu_custom_call.1} parent=1 // pred_check
      %p41 = pneg %p40
    $region19: #{tpu_custom_call.1} parent=1 // pred_check_branch
      %43 = sbr.rel (%p41) target = $region21
    $region20: #{tpu_custom_call.1} parent=1 // pred_region
      %44 = vst [vmem:[#allocation2] sm:$0xff] 0.0
      %vm45 = vcmask 523264
      %46 = vst.msk [vmem:[#allocation2 + $0x8] sm:$0xff] %vm45, 0.0
      %47 = vst [vmem:[#allocation2 + $0x10] sm:$0xff] 0.0
      %48 = vst.msk [vmem:[#allocation2 + $0x18] sm:$0xff] %vm45, 0.0
    $region21: #{tpu_custom_call.1} parent=1 // pred_fallthru
      _
    %v49 = vld [vmem:[#allocation2] sm:$0xff]
    %v50 = vld [vmem:[#allocation2 + $0x8] sm:$0xff]
    %v51 = vld [vmem:[#allocation2 + $0x10] sm:$0xff]
    %v52 = vld [vmem:[#allocation2 + $0x18] sm:$0xff]
    %v53 = vld [vmem:[#allocation3] sm:$0xff]
    %v54 = vld [vmem:[#allocation3 + $0x8] sm:$0xff]
    %v55 = vld [vmem:[#allocation6] sm:$0xff]
    %v56 = vld [vmem:[#allocation6 + $0x8] sm:$0xff]
    %v57 = vld [vmem:[#allocation6 + $0x10] sm:$0xff]
    %v58 = vld [vmem:[#allocation6 + $0x18] sm:$0xff]
    %v59 = vld [vmem:[#allocation6 + $0x20] sm:$0xff]
    %v60 = vld [vmem:[#allocation6 + $0x28] sm:$0xff]
    %v61 = vld [vmem:[#allocation6 + $0x30] sm:$0xff]
    %v62 = vld [vmem:[#allocation6 + $0x38] sm:$0xff]
    %vm63 = vcmask 261120
    %v65 = vsel %vm63, %v53, 0
    %v68 = vsel %vm63, %v54, 0
    %70 = vmatprep.subr.mxu0 0.0
    %71 = vmatpush1.msra.mxu0 0.0
    %72 = vmatprep.subr.mxu0 0.0
    %73 = vmatpush1.msra.mxu0 0.0
    %74 = vmatprep.subr.mxu0 0.0
    %75 = vmatpush1.msra.mxu0 0.0
    %76 = vmatprep.subr.mxu0 0.0
    %77 = vmatpush1.msra.mxu0 0.0
    %78 = vmatprep.subr.mxu0 0.0
    %79 = vmatpush1.msra.mxu0 0.0
    %80 = vmatprep.subr.mxu0 0.0
    %81 = vmatpush1.msra.mxu0 0.0
    %82 = vmatprep.subr.mxu0 0.0
    %83 = vmatpush1.msra.mxu0 0.0
    %84 = vmatprep.subr.mxu0 0.0
    %85 = vmatpush1.msra.mxu0 0.0
    %86 = vmatprep.subr.mxu0 0.0
    %87 = vmatpush1.msra.mxu0 0.0
    %88 = vmatprep.subr.mxu0 0.0
    %89 = vmatpush1.msra.mxu0 0.0
    %90 = vmatprep.subr.mxu0 0.0
    %91 = vmatpush1.msra.mxu0 0.0
    %92 = vmatprep.subr.mxu0 0.0
    %93 = vmatpush1.msra.mxu0 0.0
    %94 = vmatprep.subr.mxu0 %v62
    %95 = vmatpush1.msra.mxu0 %v61
    %96 = vmatprep.subr.mxu0 %v60
    %97 = vmatpush1.msra.mxu0 %v59
    %98 = vmatprep.subr.mxu0 %v58
    %99 = vmatpush1.msra.mxu0 %v57
    %100 = vmatprep.subr.mxu0 %v56
    %101 = vmatpush1.msra.mxu0 %v55
    %102 = vmatprep.subr.mxu0 0.0
    %103 = vmatpush2.msra.mxu0 0.0
    %104 = vmatprep.subr.mxu0 0.0
    %105 = vmatpush2.msra.mxu0 0.0
    %106 = vmatprep.subr.mxu0 0.0
    %107 = vmatpush2.msra.mxu0 0.0
    %108 = vmatprep.subr.mxu0 0.0
    %109 = vmatpush2.msra.mxu0 0.0
    %110 = vmatprep.subr.mxu0 0.0
    %111 = vmatpush2.msra.mxu0 0.0
    %112 = vmatprep.subr.mxu0 0.0
    %113 = vmatpush2.msra.mxu0 0.0
    %114 = vmatprep.subr.mxu0 0.0
    %115 = vmatpush2.msra.mxu0 0.0
    %116 = vmatprep.subr.mxu0 0.0
    %117 = vmatpush2.msra.mxu0 0.0
    %118 = vmatprep.subr.mxu0 0.0
    %119 = vmatpush2.msra.mxu0 0.0
    %120 = vmatprep.subr.mxu0 0.0
    %121 = vmatpush2.msra.mxu0 0.0
    %122 = vmatprep.subr.mxu0 0.0
    %123 = vmatpush2.msra.mxu0 0.0
    %124 = vmatprep.subr.mxu0 0.0
    %125 = vmatpush2.msra.mxu0 0.0
    %126 = vmatprep.subr.mxu0 0.0
    %127 = vmatpush2.msra.mxu0 0.0
    %128 = vmatprep.subr.mxu0 0.0
    %129 = vmatpush2.msra.mxu0 0.0
    %130 = vmatprep.subr.mxu0 0.0
    %131 = vmatpush2.msra.mxu0 0.0
    %132 = vmatprep.subr.mxu0 0.0
    %133 = vmatpush2.msra.mxu0 0.0
    %134 = vmatprep.mubr.f32.mxu0 0.0
    %135 = vmatmul.mubr.f32.gmra.mxu0 %v65
    %v136 = vpop.f32.mrf.mxu0
    %v137 = vadd.f32 0.0, %v136
    %v138 = vpop.f32.mrf.mxu0
    %v139 = vadd.f32 0.0, %v138
    %140 = vmatprep.mubr.f32.mxu0 0.0
    %141 = vmatmul.mubr.f32.gmra.mxu0 %v68
    %v142 = vpop.f32.mrf.mxu0
    %v143 = vadd.f32 0.0, %v142
    %v144 = vpop.f32.mrf.mxu0
    %v145 = vadd.f32 0.0, %v144
    %146 = vdwg.mxu0
    %v147 = vadd.f32 %v49, %v137
    %v148 = vadd.f32 %v50, %v139
    %v149 = vadd.f32 %v51, %v143
    %v150 = vadd.f32 %v52, %v145
    %151 = vst [vmem:[#allocation2] sm:$0xff] %v147
    %vm152 = vcmask 523264
    %153 = vst.msk [vmem:[#allocation2 + $0x8] sm:$0xff] %vm152, %v148
    %154 = vst [vmem:[#allocation2 + $0x10] sm:$0xff] %v149
    %155 = vst.msk [vmem:[#allocation2 + $0x18] sm:$0xff] %vm152, %v150
    // Predicated region
    $region22: #{tpu_custom_call.1} parent=1 // pred_check
      %p156 = pneg %p40
    $region23: #{tpu_custom_call.1} parent=1 // pred_check_branch
      %158 = sbr.rel (%p156) target = $region25
    $region24: #{tpu_custom_call.1} parent=1 // pred_region
      %v159 = vld [vmem:[#allocation2] sm:$0xff]
      %v160 = vld [vmem:[#allocation2 + $0x8] sm:$0xff]
      %v161 = vld [vmem:[#allocation2 + $0x10] sm:$0xff]
      %v162 = vld [vmem:[#allocation2 + $0x18] sm:$0xff]
      %163 = vst [vmem:[#allocation8] sm:$0xff] %v159
      %164 = vst.msk [vmem:[#allocation8 + $0x8] sm:$0xff] %vm152, %v160
      %165 = vst [vmem:[#allocation8 + $0x10] sm:$0xff] %v161
      %166 = vst.msk [vmem:[#allocation8 + $0x18] sm:$0xff] %vm152, %v162
    $region25: #{tpu_custom_call.1} parent=1 // pred_fallthru
      _
    // Predicated region
    $region26: #{tpu_custom_call.1} parent=1 // pred_check
      _
    $region27: #{tpu_custom_call.1} parent=1 // pred_check_branch
      %168 = sbr.rel (0) target = $region29
    $region28: #{tpu_custom_call.1} parent=1 // pred_region
      %s170 = ssub.s32 512, 512
      %171 = vsyncadd [#allocation5], %s170
      %s172 = sshll.u32 [#allocation8], 4
      %s173 = int_to_ptr.vmem [resolvable:$true] %s172
      %178 = dma.vmem_to_hbm [thread:$0]  %s173, 512, %s2, [#allocation5], 256, 256, 16
    $region29: #{tpu_custom_call.1} parent=1 // pred_fallthru
      _
    // Predicated region
    $region30: #{tpu_custom_call.1} parent=1 // pred_check
      _
    $region31: #{tpu_custom_call.1} parent=1 // pred_check_branch
      %180 = sbr.rel (0) target = $region33
    $region32: #{tpu_custom_call.1} parent=1 // pred_region
      %181 = dma.done [#allocation5], 512
    $region33: #{tpu_custom_call.1} parent=1 // pred_fallthru
      _
    %182 = vsyncpa [#allocation4], 1
    %183 = vsyncpa [#allocation7], 1
    %184 = vsyncpa [#allocation5], 1

</llo_original>
